<compile_context>
chip_gen: v6e
topology: v6e:2x2x1
jax: 0.10.0
libtpu: 0.0.40
codegen_flags: <defaults>
</compile_context>

<pallas_src>
import jax
import jax.numpy as jnp
from jax.experimental import pallas as pl
from jax.experimental.pallas import tpu as pltpu


def _round_up(x, m):
    return (x + m - 1) // m * m


def _feature_network_kernel(x_ref, w1_ref, b1_ref, w2_ref, b2_ref, out_ref):
    """Fused MLP forward for one batch tile: out = relu(x @ W1 + b1) @ W2 + b2.

    Shapes (per grid step):
      x_ref  : [TB, D_in]   (x dtype; cast to W1's compute dtype in-kernel)
      w1_ref : [D_in, H]    b1_ref : [1, H]      (biases always f32)
      w2_ref : [H, D_out]   b2_ref : [1, D_out]
      out_ref: [TB, D_out]
    Accumulation is f32 (preferred_element_type); bias + ReLU run in f32.
    """
    # In-kernel cast: free VPU work on an already-loaded tile (no extra HBM pass).
    x = x_ref[...].astype(w1_ref.dtype)
    h = jnp.dot(x, w1_ref[...], preferred_element_type=jnp.float32)
    h = jnp.maximum(h + b1_ref[...], 0.0)
    y = jnp.dot(h.astype(w2_ref.dtype), w2_ref[...],
                preferred_element_type=jnp.float32)
    out_ref[...] = (y + b2_ref[...]).astype(out_ref.dtype)


def feature_network_forward(x, w1, b1, w2, b2, *, block_batch=1024,
                            compute_dtype=None):
    """Fused Pallas MLP forward. x: [B, D_in] -> [B, D_out].

    block_batch:   max batch-tile rows (multiple of 8). Also capped so the batch
                   grid has >=4 steps when B is large enough (v7x megacore).
    compute_dtype: optional dtype (e.g. jnp.bfloat16) for the MXU inputs; x is
                   cast in-kernel, weights are cast here (tiny, VMEM-resident).
                   Biases, accumulation and the epilogue stay f32.
    """
    B, D_in = x.shape
    H = w1.shape[1]
    D_out = w2.shape[1]
    out_dtype = x.dtype

    # Weight / bias dtype prep (tiny; hoist to init in production use).
    if compute_dtype is not None:
        w1 = w1.astype(compute_dtype)
        w2 = w2.astype(compute_dtype)
    b1 = b1.astype(jnp.float32)
    b2 = b2.astype(jnp.float32)

    # --- Batch tile sizing -------------------------------------------------
    # * multiple of 8 (sublane granularity)
    # * <= block_batch
    # * aim for >=4 grid steps so v7x's two TensorCores both get work
    tb = max(8, _round_up(pl.cdiv(B, 4), 8))
    tb = min(tb, block_batch)
    tb = min(tb, _round_up(B, 8))
    grid = (pl.cdiv(B, tb),)   # ragged last block is masked by Pallas

    itemsize = lambda a: a.size * a.dtype.itemsize
    cost = pl.CostEstimate(
        flops=2 * B * (D_in * H + H * D_out),
        transcendentals=0,
        bytes_accessed=(itemsize(x) + itemsize(w1) + itemsize(w2)
                        + itemsize(b1) + itemsize(b2)
                        + B * D_out * jnp.dtype(out_dtype).itemsize),
    )

    out = pl.pallas_call(
        _feature_network_kernel,
        out_shape=jax.ShapeDtypeStruct((B, D_out), out_dtype),
        grid_spec=pltpu.PrefetchScalarGridSpec(
            num_scalar_prefetch=0,
            grid=grid,
            in_specs=[
                # x: tiled along batch -> double-buffered DMA per grid step.
                pl.BlockSpec((tb, D_in), lambda i: (i, 0)),
                # Weights / biases: constant block index -> resident in VMEM.
                pl.BlockSpec((D_in, H), lambda i: (0, 0)),
                pl.BlockSpec((1, H), lambda i: (0, 0)),
                pl.BlockSpec((H, D_out), lambda i: (0, 0)),
                pl.BlockSpec((1, D_out), lambda i: (0, 0)),
            ],
            out_specs=pl.BlockSpec((tb, D_out), lambda i: (i, 0)),
        ),
        compiler_params=pltpu.CompilerParams(
            dimension_semantics=("parallel",)),
        cost_estimate=cost,
    )(x, w1, b1, w2, b2)
    return out


def init_feature_network_params(key, input_dim, representation_dim,
                                hidden_dims=(64,), dtype=jnp.float32):
    """Deterministic parameter init matching nn.Linear shapes.

    PyTorch nn.Linear(in, out) stores weight as [out, in]; we keep the
    transpose [in, out] so the kernel computes x @ W. Biases are [1, out].
    """
    params = []
    prev = input_dim
    dims = list(hidden_dims) + [representation_dim]
    for d in dims:
        key, kw, kb = jax.random.split(key, 3)
        bound = 1.0 / jnp.sqrt(prev)  # PyTorch default uniform bound
        w = jax.random.uniform(kw, (prev, d), dtype, minval=-bound, maxval=bound)
        b = jax.random.uniform(kb, (1, d), dtype, minval=-bound, maxval=bound)
        params.append((w, b))
        prev = d
    return params


def reference_forward(x, params):
    """Plain-JAX reference for correctness checking."""
    h = x
    for i, (w, b) in enumerate(params):
        h = h @ w + b
        if i < len(params) - 1:
            h = jnp.maximum(h, 0.0)
    return h


if __name__ == "__main__":
    # Shapes consistent with FeatureNetwork.forward(x: [batch, input_dim]).
    input_dim, hidden_dim, representation_dim = 16, 64, 32

    key = jax.random.PRNGKey(0)
    params = init_feature_network_params(
        key, input_dim, representation_dim, hidden_dims=(hidden_dim,))
    (w1, b1), (w2, b2) = params

    # --- Test 1: small batch, single grid step, f32 compute. ---
    key, kx = jax.random.split(key)
    x_small = jax.random.normal(kx, (8, input_dim), jnp.float32)
    out_small = jax.block_until_ready(
        feature_network_forward(x_small, w1, b1, w2, b2))
    ref_small = reference_forward(x_small, params)
    assert out_small.shape == (8, representation_dim)
    assert jnp.allclose(out_small, ref_small, atol=1e-4, rtol=1e-4), \
        "f32 small-batch mismatch vs reference"

    # --- Test 2: batch not divisible by the tile -> ragged final block. ---
    key, kx = jax.random.split(key)
    x_big = jax.random.normal(kx, (200, input_dim), jnp.float32)
    out_big = jax.block_until_ready(
        feature_network_forward(x_big, w1, b1, w2, b2, block_batch=64))
    ref_big = reference_forward(x_big, params)
    assert out_big.shape == (200, representation_dim)
    assert jnp.allclose(out_big, ref_big, atol=1e-4, rtol=1e-4), \
        "f32 tiled-batch mismatch vs reference"

    # --- Test 3: bf16 MXU inputs (in-kernel x cast), f32 accumulation. ---
    out_bf16 = jax.block_until_ready(
        feature_network_forward(x_big, w1, b1, w2, b2, block_batch=64,
                                compute_dtype=jnp.bfloat16))
    assert out_bf16.shape == (200, representation_dim)
    assert jnp.allclose(out_bf16, ref_big, atol=5e-2, rtol=5e-2), \
        "bf16 mismatch vs reference"

    print("KERNEL_OK")
</pallas_src>

<mosaic_0001>
module attributes {stable_mosaic.version = 11 : i64} {
  func.func @_feature_network_kernel(%arg0: i32, %arg1: memref<8x16xf32, #tpu.memory_space<vmem>>, %arg2: memref<16x64xf32, #tpu.memory_space<vmem>>, %arg3: memref<1x64xf32, #tpu.memory_space<vmem>>, %arg4: memref<64x32xf32, #tpu.memory_space<vmem>>, %arg5: memref<1x32xf32, #tpu.memory_space<vmem>>, %arg6: memref<8x32xf32, #tpu.memory_space<vmem>>) attributes {dimension_semantics = [#tpu.dimension_semantics<parallel>], iteration_bounds = array<i64: 1>, scalar_prefetch = 0 : i64, scratch_operands = 0 : i64, tpu.core_type = #tpu.core_type<tc>, window_params = [{transform_indices = @transform_0, window_bounds = array<i64: 8, 16>}, {pipeline_mode = #tpu.pipeline_mode<synchronous>, transform_indices = @transform_1, window_bounds = array<i64: 16, 64>}, {pipeline_mode = #tpu.pipeline_mode<synchronous>, transform_indices = @transform_2, window_bounds = array<i64: 1, 64>}, {pipeline_mode = #tpu.pipeline_mode<synchronous>, transform_indices = @transform_3, window_bounds = array<i64: 64, 32>}, {pipeline_mode = #tpu.pipeline_mode<synchronous>, transform_indices = @transform_4, window_bounds = array<i64: 1, 32>}, {transform_indices = @transform_5, window_bounds = array<i64: 8, 32>}]} {
    %c0 = arith.constant 0 : index
    %c0_0 = arith.constant 0 : index
    %0 = vector.load %arg1[%c0, %c0_0] : memref<8x16xf32, #tpu.memory_space<vmem>>, vector<8x16xf32>
    %c0_1 = arith.constant 0 : index
    %c0_2 = arith.constant 0 : index
    %1 = vector.load %arg2[%c0_1, %c0_2] : memref<16x64xf32, #tpu.memory_space<vmem>>, vector<16x64xf32>
    %cst = arith.constant dense<0.000000e+00> : vector<8x64xf32>
    %2 = tpu.matmul %0, %1, %cst {dimension_numbers = #tpu.dot_dimension_numbers<[1], [0], [0], [1], [0, 0, 1, 1], [], []>} : vector<8x16xf32>, vector<16x64xf32>, vector<8x64xf32> -> vector<8x64xf32>
    %c0_3 = arith.constant 0 : index
    %c0_4 = arith.constant 0 : index
    %3 = vector.load %arg3[%c0_3, %c0_4] : memref<1x64xf32, #tpu.memory_space<vmem>>, vector<1x64xf32>
    %4 = vector.broadcast %3 : vector<1x64xf32> to vector<8x64xf32>
    %5 = arith.addf %2, %4 : vector<8x64xf32>
    %cst_5 = arith.constant 0.000000e+00 : f32
    %6 = vector.broadcast %cst_5 : f32 to vector<8x64xf32>
    %7 = arith.maximumf %5, %6 : vector<8x64xf32>
    %c0_6 = arith.constant 0 : index
    %c0_7 = arith.constant 0 : index
    %8 = vector.load %arg4[%c0_6, %c0_7] : memref<64x32xf32, #tpu.memory_space<vmem>>, vector<64x32xf32>
    %cst_8 = arith.constant dense<0.000000e+00> : vector<8x32xf32>
    %9 = tpu.matmul %7, %8, %cst_8 {dimension_numbers = #tpu.dot_dimension_numbers<[1], [0], [0], [1], [0, 0, 1, 1], [], []>} : vector<8x64xf32>, vector<64x32xf32>, vector<8x32xf32> -> vector<8x32xf32>
    %c0_9 = arith.constant 0 : index
    %c0_10 = arith.constant 0 : index
    %10 = vector.load %arg5[%c0_9, %c0_10] : memref<1x32xf32, #tpu.memory_space<vmem>>, vector<1x32xf32>
    %11 = vector.broadcast %10 : vector<1x32xf32> to vector<8x32xf32>
    %12 = arith.addf %9, %11 : vector<8x32xf32>
    %c0_11 = arith.constant 0 : index
    %c0_12 = arith.constant 0 : index
    %13 = vector.load %arg6[%c0_11, %c0_12] : memref<8x32xf32, #tpu.memory_space<vmem>>, vector<8x32xf32>
    tpu.vector_store %arg6[%c0_11, %c0_12], %12 {strides = array<i32>} : memref<8x32xf32, #tpu.memory_space<vmem>>, vector<8x32xf32>,
    return
  }
  func.func @transform_0(%arg0: i32) -> (i32, i32) {
    %c0_i32 = arith.constant 0 : i32
    %c0_i32_0 = arith.constant 0 : i32
    return %arg0, %c0_i32 : i32, i32
  }
  func.func @transform_1(%arg0: i32) -> (i32, i32) {
    %c0_i32 = arith.constant 0 : i32
    %c0_i32_0 = arith.constant 0 : i32
    %c0_i32_1 = arith.constant 0 : i32
    return %c0_i32, %c0_i32_0 : i32, i32
  }
  func.func @transform_2(%arg0: i32) -> (i32, i32) {
    %c0_i32 = arith.constant 0 : i32
    %c0_i32_0 = arith.constant 0 : i32
    %c0_i32_1 = arith.constant 0 : i32
    return %c0_i32, %c0_i32_0 : i32, i32
  }
  func.func @transform_3(%arg0: i32) -> (i32, i32) {
    %c0_i32 = arith.constant 0 : i32
    %c0_i32_0 = arith.constant 0 : i32
    %c0_i32_1 = arith.constant 0 : i32
    return %c0_i32, %c0_i32_0 : i32, i32
  }
  func.func @transform_4(%arg0: i32) -> (i32, i32) {
    %c0_i32 = arith.constant 0 : i32
    %c0_i32_0 = arith.constant 0 : i32
    %c0_i32_1 = arith.constant 0 : i32
    return %c0_i32, %c0_i32_0 : i32, i32
  }
  func.func @transform_5(%arg0: i32) -> (i32, i32) {
    %c0_i32 = arith.constant 0 : i32
    %c0_i32_0 = arith.constant 0 : i32
    return %arg0, %c0_i32 : i32, i32
  }
}

</mosaic_0001>

<llo_original>
// kernel: tpu_custom_call.1
$region0: #{tpu_custom_call.1}
  #allocation0 [shape = 'u32[]', space=smem, size = 0x4, offset = 0x4, fixed_abs, tag = 'smem constant byte address 0x4 - core index']
  #allocation1 [shape = 'u32[144,128]{1,0:T(1,128)}', space=vmem, size = 0x12000, scoped, tag = 'internal scratch']
  %s0 = inlined_call_operand.vmem [shape: f32[8,16], index: 0, kind: input, shape index: {}]
  %s1 = inlined_call_operand.vmem [shape: f32[16,64], index: 1, kind: input, shape index: {}]
  %s2 = inlined_call_operand.vmem [shape: f32[1,64], index: 2, kind: input, shape index: {}]
  %s3 = inlined_call_operand.vmem [shape: f32[64,32], index: 3, kind: input, shape index: {}]
  %s4 = inlined_call_operand.vmem [shape: f32[1,32], index: 4, kind: input, shape index: {}]
  %s5 = inlined_call_operand.hbm [shape: f32[8,32], index: 5, kind: output, shape index: {}]
  %s6 = sld [smem:[#allocation0]]
  $region30: #{tpu_custom_call.1} parent=0
    _
  %s8 = ssub.s32 1, %s6
  %s9 = scalar_select 0, %s8, %s6
  $region1: #{tpu_custom_call.1} parent=0
    #allocation2 [shape = 'u8[4096]{0}', space=vmem, size = 0x1000, scoped, tag = 'output window, operand 0, single buffered']
    #allocation3 [shape = 's32[1]{0}', space=sflag, size = 0x4, scoped, tag = 'scoped memory for tpu_custom_call.1']
    %10 = vsyncpa [#allocation3], 0
    // Predicated region
    $region2: #{tpu_custom_call.1} parent=1 // pred_check
      _
    $region3: #{tpu_custom_call.1} parent=1 // pred_check_branch
      %12 = sbr.rel (0) target = $region5
    $region4: #{tpu_custom_call.1} parent=1 // pred_region
      _
    $region5: #{tpu_custom_call.1} parent=1 // pred_fallthru
      _
    // Predicated region
    $region6: #{tpu_custom_call.1} parent=1 // pred_check
      _
    $region7: #{tpu_custom_call.1} parent=1 // pred_check_branch
      %14 = sbr.rel (0) target = $region9
    $region8: #{tpu_custom_call.1} parent=1 // pred_region
      _
    $region9: #{tpu_custom_call.1} parent=1 // pred_fallthru
      _
    // Predicated region
    $region10: #{tpu_custom_call.1} parent=1 // pred_check
      _
    $region11: #{tpu_custom_call.1} parent=1 // pred_check_branch
      %16 = sbr.rel (0) target = $region13
    $region12: #{tpu_custom_call.1} parent=1 // pred_region
      _
    $region13: #{tpu_custom_call.1} parent=1 // pred_fallthru
      _
    // Predicated region
    $region14: #{tpu_custom_call.1} parent=1 // pred_check
      _
    $region15: #{tpu_custom_call.1} parent=1 // pred_check_branch
      %18 = sbr.rel (0) target = $region17
    $region16: #{tpu_custom_call.1} parent=1 // pred_region
      _
    $region17: #{tpu_custom_call.1} parent=1 // pred_fallthru
      _
    // Predicated region
    $region18: #{tpu_custom_call.1} parent=1 // pred_check
      _
    $region19: #{tpu_custom_call.1} parent=1 // pred_check_branch
      %20 = sbr.rel (0) target = $region21
    $region20: #{tpu_custom_call.1} parent=1 // pred_region
      _
    $region21: #{tpu_custom_call.1} parent=1 // pred_fallthru
      _
    %v21 = vld [vmem:[%s0] sm:$0xff]
    %v22 = vld [vmem:[%s1] sm:$0xff]
    %v23 = vld [vmem:[%s1 + $0x8] sm:$0xff]
    %v24 = vld [vmem:[%s2] sm:$0x1]
    %v26 = vlaneseq
    %v27 = vshrl.u32 %v26, 7
    %v28 = vsub.s32 0, %v27
    %v29 = vrot.slane %v24, %v28
    %vm31 = vcmask 130048
    %v33 = vsel %vm31, %v21, 0
    %35 = vmatprep.subr.mxu0 0.0
    %36 = vmatpush1.msra.mxu0 0.0
    %37 = vmatprep.subr.mxu0 0.0
    %38 = vmatpush1.msra.mxu0 0.0
    %39 = vmatprep.subr.mxu0 0.0
    %40 = vmatpush1.msra.mxu0 0.0
    %41 = vmatprep.subr.mxu0 0.0
    %42 = vmatpush1.msra.mxu0 0.0
    %43 = vmatprep.subr.mxu0 0.0
    %44 = vmatpush1.msra.mxu0 0.0
    %45 = vmatprep.subr.mxu0 0.0
    %46 = vmatpush1.msra.mxu0 0.0
    %47 = vmatprep.subr.mxu0 0.0
    %48 = vmatpush1.msra.mxu0 0.0
    %49 = vmatprep.subr.mxu0 0.0
    %50 = vmatpush1.msra.mxu0 0.0
    %51 = vmatprep.subr.mxu0 0.0
    %52 = vmatpush1.msra.mxu0 0.0
    %53 = vmatprep.subr.mxu0 0.0
    %54 = vmatpush1.msra.mxu0 0.0
    %55 = vmatprep.subr.mxu0 0.0
    %56 = vmatpush1.msra.mxu0 0.0
    %57 = vmatprep.subr.mxu0 0.0
    %58 = vmatpush1.msra.mxu0 0.0
    %59 = vmatprep.subr.mxu0 0.0
    %60 = vmatpush1.msra.mxu0 0.0
    %61 = vmatprep.subr.mxu0 0.0
    %62 = vmatpush1.msra.mxu0 0.0
    %63 = vmatprep.subr.mxu0 0.0
    %64 = vmatpush1.msra.mxu0 %v23
    %65 = vmatprep.subr.mxu0 0.0
    %66 = vmatpush1.msra.mxu0 %v22
    %67 = vmatprep.subr.mxu0 0.0
    %68 = vmatpush2.msra.mxu0 0.0
    %69 = vmatprep.subr.mxu0 0.0
    %70 = vmatpush2.msra.mxu0 0.0
    %71 = vmatprep.subr.mxu0 0.0
    %72 = vmatpush2.msra.mxu0 0.0
    %73 = vmatprep.subr.mxu0 0.0
    %74 = vmatpush2.msra.mxu0 0.0
    %75 = vmatprep.subr.mxu0 0.0
    %76 = vmatpush2.msra.mxu0 0.0
    %77 = vmatprep.subr.mxu0 0.0
    %78 = vmatpush2.msra.mxu0 0.0
    %79 = vmatprep.subr.mxu0 0.0
    %80 = vmatpush2.msra.mxu0 0.0
    %81 = vmatprep.subr.mxu0 0.0
    %82 = vmatpush2.msra.mxu0 0.0
    %83 = vmatprep.subr.mxu0 0.0
    %84 = vmatpush2.msra.mxu0 0.0
    %85 = vmatprep.subr.mxu0 0.0
    %86 = vmatpush2.msra.mxu0 0.0
    %87 = vmatprep.subr.mxu0 0.0
    %88 = vmatpush2.msra.mxu0 0.0
    %89 = vmatprep.subr.mxu0 0.0
    %90 = vmatpush2.msra.mxu0 0.0
    %91 = vmatprep.subr.mxu0 0.0
    %92 = vmatpush2.msra.mxu0 0.0
    %93 = vmatprep.subr.mxu0 0.0
    %94 = vmatpush2.msra.mxu0 0.0
    %95 = vmatprep.subr.mxu0 0.0
    %96 = vmatpush2.msra.mxu0 0.0
    %97 = vmatprep.subr.mxu0 0.0
    %98 = vmatpush2.msra.mxu0 0.0
    %99 = vmatprep.mubr.f32.mxu0 0.0
    %100 = vmatmul.mubr.f32.gmra.mxu0 %v33
    %v101 = vpop.f32.mrf.mxu0
    %v102 = vadd.f32 %v29, %v101
    %v103 = vpop.f32.mrf.mxu0
    %104 = vdwg.mxu0
    %v105 = vmax.f32 %v102, 0.0
    %v106 = vld [vmem:[%s3] sm:$0xff]
    %v107 = vld [vmem:[%s3 + $0x8] sm:$0xff]
    %v108 = vld [vmem:[%s3 + $0x10] sm:$0xff]
    %v109 = vld [vmem:[%s3 + $0x18] sm:$0xff]
    %v110 = vld [vmem:[%s3 + $0x20] sm:$0xff]
    %v111 = vld [vmem:[%s3 + $0x28] sm:$0xff]
    %v112 = vld [vmem:[%s3 + $0x30] sm:$0xff]
    %v113 = vld [vmem:[%s3 + $0x38] sm:$0xff]
    %v114 = vld [vmem:[%s4] sm:$0x1]
    %v116 = vlaneseq
    %v117 = vshrl.u32 %v116, 7
    %v118 = vsub.s32 0, %v117
    %v119 = vrot.slane %v114, %v118
    %vm121 = vcmask 523264
    %v123 = vsel %vm121, %v105, 0
    %125 = vmatprep.subr.mxu0 0.0
    %126 = vmatpush1.msra.mxu0 0.0
    %127 = vmatprep.subr.mxu0 0.0
    %128 = vmatpush1.msra.mxu0 0.0
    %129 = vmatprep.subr.mxu0 0.0
    %130 = vmatpush1.msra.mxu0 0.0
    %131 = vmatprep.subr.mxu0 0.0
    %132 = vmatpush1.msra.mxu0 0.0
    %133 = vmatprep.subr.mxu0 0.0
    %134 = vmatpush1.msra.mxu0 0.0
    %135 = vmatprep.subr.mxu0 0.0
    %136 = vmatpush1.msra.mxu0 0.0
    %137 = vmatprep.subr.mxu0 0.0
    %138 = vmatpush1.msra.mxu0 0.0
    %139 = vmatprep.subr.mxu0 0.0
    %140 = vmatpush1.msra.mxu0 0.0
    %141 = vmatprep.subr.mxu0 0.0
    %142 = vmatpush1.msra.mxu0 %v113
    %143 = vmatprep.subr.mxu0 0.0
    %144 = vmatpush1.msra.mxu0 %v112
    %145 = vmatprep.subr.mxu0 0.0
    %146 = vmatpush1.msra.mxu0 %v111
    %147 = vmatprep.subr.mxu0 0.0
    %148 = vmatpush1.msra.mxu0 %v110
    %149 = vmatprep.subr.mxu0 0.0
    %150 = vmatpush1.msra.mxu0 %v109
    %151 = vmatprep.subr.mxu0 0.0
    %152 = vmatpush1.msra.mxu0 %v108
    %153 = vmatprep.subr.mxu0 0.0
    %154 = vmatpush1.msra.mxu0 %v107
    %155 = vmatprep.subr.mxu0 0.0
    %156 = vmatpush1.msra.mxu0 %v106
    %157 = vmatprep.subr.mxu0 0.0
    %158 = vmatpush2.msra.mxu0 0.0
    %159 = vmatprep.subr.mxu0 0.0
    %160 = vmatpush2.msra.mxu0 0.0
    %161 = vmatprep.subr.mxu0 0.0
    %162 = vmatpush2.msra.mxu0 0.0
    %163 = vmatprep.subr.mxu0 0.0
    %164 = vmatpush2.msra.mxu0 0.0
    %165 = vmatprep.subr.mxu0 0.0
    %166 = vmatpush2.msra.mxu0 0.0
    %167 = vmatprep.subr.mxu0 0.0
    %168 = vmatpush2.msra.mxu0 0.0
    %169 = vmatprep.subr.mxu0 0.0
    %170 = vmatpush2.msra.mxu0 0.0
    %171 = vmatprep.subr.mxu0 0.0
    %172 = vmatpush2.msra.mxu0 0.0
    %173 = vmatprep.subr.mxu0 0.0
    %174 = vmatpush2.msra.mxu0 0.0
    %175 = vmatprep.subr.mxu0 0.0
    %176 = vmatpush2.msra.mxu0 0.0
    %177 = vmatprep.subr.mxu0 0.0
    %178 = vmatpush2.msra.mxu0 0.0
    %179 = vmatprep.subr.mxu0 0.0
    %180 = vmatpush2.msra.mxu0 0.0
    %181 = vmatprep.subr.mxu0 0.0
    %182 = vmatpush2.msra.mxu0 0.0
    %183 = vmatprep.subr.mxu0 0.0
    %184 = vmatpush2.msra.mxu0 0.0
    %185 = vmatprep.subr.mxu0 0.0
    %186 = vmatpush2.msra.mxu0 0.0
    %187 = vmatprep.subr.mxu0 0.0
    %188 = vmatpush2.msra.mxu0 0.0
    %189 = vmatprep.mubr.f32.mxu0 0.0
    %190 = vmatmul.mubr.f32.gmra.mxu0 %v123
    %v191 = vpop.f32.mrf.mxu0
    %v192 = vadd.f32 %v119, %v191
    %v193 = vpop.f32.mrf.mxu0
    %194 = vdwg.mxu0
    %vm195 = vcmask 261120
    %196 = vst.msk [vmem:[#allocation2] sm:$0xff] %vm195, %v192
    // Predicated region
    $region22: #{tpu_custom_call.1} parent=1 // pred_check
      _
    $region23: #{tpu_custom_call.1} parent=1 // pred_check_branch
      %198 = sbr.rel (0) target = $region25
    $region24: #{tpu_custom_call.1} parent=1 // pred_region
      %s200 = ssub.s32 128, 128
      %201 = vsyncadd [#allocation3], %s200
      %s203 = sshll.u32 [#allocation2], 4
      %s204 = int_to_ptr.vmem [resolvable:$true] %s203
      %206 = dma.vmem_to_hbm [thread:$0]  %s204, 128, %s5, [#allocation3]
    $region25: #{tpu_custom_call.1} parent=1 // pred_fallthru
      _
    // Predicated region
    $region26: #{tpu_custom_call.1} parent=1 // pred_check
      _
    $region27: #{tpu_custom_call.1} parent=1 // pred_check_branch
      %208 = sbr.rel (0) target = $region29
    $region28: #{tpu_custom_call.1} parent=1 // pred_region
      %209 = dma.done [#allocation3], 128
    $region29: #{tpu_custom_call.1} parent=1 // pred_fallthru
      _
    %210 = vsyncpa [#allocation3], 1

</llo_original>
